<compile_context>
chip_gen: v6e
topology: v6e:2x2x1
jax: 0.10.0
libtpu: 0.0.40
codegen_flags: <defaults>
</compile_context>

<pallas_src>
import functools
import math

import numpy as np
import jax
import jax.numpy as jnp
from jax import lax
from jax.experimental import pallas as pl
from jax.experimental.pallas import tpu as pltpu


LANE = 128  # TPU lane width; per-head channel blocks are padded to this.


def _vmem_limit_bytes():
    """Chip-aware scoped-VMEM budget: half of physical VMEM, capped at 64 MiB.

    v5e/v6e (128 MiB)  -> 64 MiB  (lets tiles grow past the 32 MiB default)
    v7x     (64 MiB)   -> 32 MiB  (do NOT over-commit the smaller VMEM)
    """
    try:
        cap = pltpu.get_tpu_info().vmem_capacity_bytes
    except Exception:
        cap = 64 * 1024 * 1024
    return int(min(cap // 2, 64 * 1024 * 1024))


VMEM_LIMIT_BYTES = _vmem_limit_bytes()


# ----------------------------------------------------------------------------
# Pallas kernels
# ----------------------------------------------------------------------------
def linear_kernel(x_ref, w_ref, o_ref, acc_ref):
    # y = x @ W   (W already transposed to (K, N)); bf16 in, f32 accumulate,
    # K-reduction over the innermost ("arbitrary") grid axis.
    @pl.when(pl.program_id(2) == 0)
    def _():
        acc_ref[...] = jnp.zeros_like(acc_ref)

    acc_ref[...] += jnp.dot(
        x_ref[...], w_ref[...], preferred_element_type=jnp.float32
    )

    @pl.when(pl.program_id(2) == pl.num_programs(2) - 1)
    def _():
        o_ref[...] = acc_ref[...].astype(o_ref.dtype)


def linear_bias_kernel(x_ref, w_ref, b_ref, o_ref, acc_ref):
    @pl.when(pl.program_id(2) == 0)
    def _():
        acc_ref[...] = jnp.zeros_like(acc_ref)

    acc_ref[...] += jnp.dot(
        x_ref[...], w_ref[...], preferred_element_type=jnp.float32
    )

    @pl.when(pl.program_id(2) == pl.num_programs(2) - 1)
    def _():
        o_ref[...] = (acc_ref[...] + b_ref[...]).astype(o_ref.dtype)


def attn_kernel(q_ref, kv_ref, o_ref, *, heads, head_dim):
    # q_ref : (1, BQ, Cp)   queries, softmax scale folded into Wq, head blocks
    #                       zero-padded so each head starts at a 128-lane offset
    # kv_ref: (1, M, 2*Cp)  fused [K | V] projection output (same padding)
    # o_ref : (1, BQ, Cp)
    q = q_ref[0]           # (BQ, Cp)  bf16
    kv = kv_ref[0]         # (M, 2Cp)  bf16
    cp = heads * head_dim

    for h in range(heads):                         # static unroll over heads
        lo = h * head_dim                          # multiple of 128 -> aligned
        qh = q[:, lo:lo + head_dim]                # (BQ, Dp)
        kh = kv[:, lo:lo + head_dim]               # (M,  Dp)
        vh = kv[:, cp + lo:cp + lo + head_dim]     # (M,  Dp)

        # scores = qh @ kh^T without materializing a transposed copy.
        s = lax.dot_general(
            qh, kh,
            dimension_numbers=(((1,), (1,)), ((), ())),
            preferred_element_type=jnp.float32,
        )                                          # (BQ, M) f32 -- only live tile
        s = s - jnp.max(s, axis=-1, keepdims=True)
        s = jnp.exp(s)
        denom = jnp.sum(s, axis=-1, keepdims=True)  # (BQ, 1) f32

        # PV first; normalize afterwards on the small (BQ, Dp) tile (EUP recip).
        oh = jnp.dot(s.astype(vh.dtype), vh,
                     preferred_element_type=jnp.float32)       # (BQ, Dp) f32
        oh = oh * pl.reciprocal(denom, approx=True)

        # Lane-aligned store directly into the output block (no concat, no
        # H simultaneously-live f32 head outputs).
        o_ref[0, :, lo:lo + head_dim] = oh.astype(o_ref.dtype)


# ----------------------------------------------------------------------------
# Wrappers
# ----------------------------------------------------------------------------
def _linear(x2d, w_t, bias=None, *, out_dtype,
            block_m=512, block_n=512, block_k=512):
    """x2d: (M, K), w_t: (K, N) (already transposed), bias: (N,) f32 or None."""
    m, k = x2d.shape
    n = w_t.shape[1]
    bm = min(block_m, m)
    bn = min(block_n, n)
    bk = min(block_k, k)
    if k % bk != 0:
        # Avoid accumulating over out-of-bounds (undefined) K padding.
        bk = k
    grid = (pl.cdiv(m, bm), pl.cdiv(n, bn), pl.cdiv(k, bk))

    in_specs = [
        pl.BlockSpec((bm, bk), lambda i, j, kb: (i, kb)),
        pl.BlockSpec((bk, bn), lambda i, j, kb: (kb, j)),
    ]
    operands = [x2d, w_t]
    if bias is not None:
        kernel = linear_bias_kernel
        in_specs.append(pl.BlockSpec((1, bn), lambda i, j, kb: (0, j)))
        operands.append(bias.reshape(1, n).astype(jnp.float32))
    else:
        kernel = linear_kernel

    bytes_accessed = (
        x2d.size * x2d.dtype.itemsize
        + w_t.size * w_t.dtype.itemsize
        + m * n * np.dtype(out_dtype).itemsize
    )

    return pl.pallas_call(
        kernel,
        out_shape=jax.ShapeDtypeStruct((m, n), out_dtype),
        grid=grid,
        in_specs=in_specs,
        out_specs=pl.BlockSpec((bm, bn), lambda i, j, kb: (i, j)),
        scratch_shapes=[pltpu.VMEM((bm, bn), jnp.float32)],
        compiler_params=pltpu.CompilerParams(
            dimension_semantics=("parallel", "parallel", "arbitrary"),
            vmem_limit_bytes=VMEM_LIMIT_BYTES,
        ),
        cost_estimate=pl.CostEstimate(
            flops=2 * m * n * k,
            transcendentals=0,
            bytes_accessed=bytes_accessed,
        ),
    )(*operands)


def _attention(q3, kv3, *, heads, head_dim, block_q=512):
    """q3: (B, N, Cp) scaled queries, kv3: (B, M, 2Cp) fused [K|V] -> (B, N, Cp)."""
    b, n, cp = q3.shape
    m = kv3.shape[1]
    bq = min(block_q, n)
    grid = (b, pl.cdiv(n, bq))

    kernel = functools.partial(attn_kernel, heads=heads, head_dim=head_dim)
    bytes_accessed = (
        q3.size * q3.dtype.itemsize
        + kv3.size * kv3.dtype.itemsize
        + b * n * cp * q3.dtype.itemsize
    )
    # On v7x (2 TCs) split the grid on the batch axis so the two cores do not
    # both DMA the same kv block; with b == 1 keep the query axis parallel.
    qi_sem = "arbitrary" if b >= 2 else "parallel"

    kv_index_map = lambda bi, qi: (bi, 0, 0)

    def build(kv_spec):
        return pl.pallas_call(
            kernel,
            out_shape=jax.ShapeDtypeStruct((b, n, cp), q3.dtype),
            grid=grid,
            in_specs=[
                pl.BlockSpec((1, bq, cp), lambda bi, qi: (bi, qi, 0)),
                kv_spec,
            ],
            out_specs=pl.BlockSpec((1, bq, cp), lambda bi, qi: (bi, qi, 0)),
            compiler_params=pltpu.CompilerParams(
                dimension_semantics=("parallel", qi_sem),
                vmem_limit_bytes=VMEM_LIMIT_BYTES,
            ),
            cost_estimate=pl.CostEstimate(
                flops=4 * b * n * m * cp,
                transcendentals=b * heads * n * m,
                bytes_accessed=bytes_accessed,
            ),
        )

    try:
        # kv block index is constant across the qi axis: single-buffer it so
        # only one (M, 2Cp) copy is resident in VMEM.
        kv_spec = pl.BlockSpec((1, m, 2 * cp), kv_index_map,
                               pipeline_mode=pl.Buffered(1))
        return build(kv_spec)(q3, kv3)
    except Exception:
        # Fallback for runtimes without single-buffering support.
        kv_spec = pl.BlockSpec((1, m, 2 * cp), kv_index_map)
        return build(kv_spec)(q3, kv3)


def cross_attention(x, context, params, heads, *, mxu_dtype=jnp.bfloat16,
                    out_dtype=jnp.float32):
    """Pallas implementation of CrossAttention.forward (bf16 MXU, f32 accum).

    Set out_dtype=jnp.bfloat16 if the downstream consumer accepts bf16 (halves
    the final HBM writeback); bias add is done in f32 inside the kernel either
    way.
    """
    b, n, c = x.shape
    m = context.shape[1]
    cctx = context.shape[2]
    assert c % heads == 0, "query_dim must be divisible by heads"
    d = c // heads
    dp = ((d + LANE - 1) // LANE) * LANE      # lane-aligned (padded) head dim
    cp = heads * dp
    scale = d ** (-0.5)

    # ---- parameter prep (would be done once at load time in a real model) ---
    # Fold softmax scale into Wq; fuse Wk & Wv; pre-transpose; zero-pad each
    # head's output channel block to dp lanes; cast to bf16.
    def pad_head_cols(w_t):                   # (K, heads*d) -> (K, heads*dp)
        if dp == d:
            return w_t
        kdim = w_t.shape[0]
        return jnp.pad(
            w_t.reshape(kdim, heads, d), ((0, 0), (0, 0), (0, dp - d))
        ).reshape(kdim, cp)

    wq_t = pad_head_cols(params["Wq"].T * scale).astype(mxu_dtype)   # (C, Cp)
    wkv_t = jnp.concatenate(
        [pad_head_cols(params["Wk"].T), pad_head_cols(params["Wv"].T)], axis=1
    ).astype(mxu_dtype)                                              # (Cctx, 2Cp)
    if dp == d:
        wo_t = params["Wo"].T.astype(mxu_dtype)                      # (Cp, C)
    else:
        # Zero rows for the padded head lanes keep the out-projection exact.
        wo_t = jnp.pad(
            params["Wo"].T.reshape(heads, d, c), ((0, 0), (0, dp - d), (0, 0))
        ).reshape(cp, c).astype(mxu_dtype)
    bo = params["bo"].astype(jnp.float32)                            # (C,)

    x2d = x.reshape(b * n, c).astype(mxu_dtype)
    ctx2d = context.reshape(b * m, cctx).astype(mxu_dtype)

    # ---- projections --------------------------------------------------------
    q = _linear(x2d, wq_t, out_dtype=mxu_dtype)      # (b*n, Cp), scale folded in
    kv = _linear(ctx2d, wkv_t, out_dtype=mxu_dtype)  # (b*m, 2Cp) fused K|V

    # Keep (b, seq, h*dp) layout: no (0,2,1,3) transposes through HBM.
    q3 = q.reshape(b, n, cp)
    kv3 = kv.reshape(b, m, 2 * cp)

    # ---- attention -----------------------------------------------------------
    attn_out = _attention(q3, kv3, heads=heads, head_dim=dp)   # (b, n, cp) bf16

    # ---- output projection ---------------------------------------------------
    out = _linear(attn_out.reshape(b * n, cp), wo_t, bias=bo,
                  out_dtype=out_dtype)                          # (b*n, C)
    return out.reshape(b, n, c)


# ----------------------------------------------------------------------------
# Pure-JAX f32 reference (correctness check only)
# ----------------------------------------------------------------------------
def cross_attention_ref(x, context, params, heads):
    b, n, c = x.shape
    m = context.shape[1]
    h = heads
    d = c // h
    scale = d ** (-0.5)
    q = (x @ params["Wq"].T).reshape(b, n, h, d).transpose(0, 2, 1, 3)
    k = (context @ params["Wk"].T).reshape(b, m, h, d).transpose(0, 2, 1, 3)
    v = (context @ params["Wv"].T).reshape(b, m, h, d).transpose(0, 2, 1, 3)
    attn = jnp.einsum("bhnd,bhmd->bhnm", q, k) * scale
    attn = jax.nn.softmax(attn, axis=-1)
    out = jnp.einsum("bhnm,bhmd->bhnd", attn, v)
    out = out.transpose(0, 2, 1, 3).reshape(b, n, c)
    return out @ params["Wo"].T + params["bo"]


# ----------------------------------------------------------------------------
# Main
# ----------------------------------------------------------------------------
if __name__ == "__main__":
    B, N, M = 2, 16, 8                 # batch, query seq, context seq
    QUERY_DIM, CONTEXT_DIM = 32, 16
    HEADS = 4

    key = jax.random.PRNGKey(0)
    kx, kc, kq, kk, kv, ko, kb = jax.random.split(key, 7)

    x = jax.random.normal(kx, (B, N, QUERY_DIM), jnp.float32)
    context = jax.random.normal(kc, (B, M, CONTEXT_DIM), jnp.float32)

    # Deterministic parameter init (torch Linear weight shape: (out, in)).
    def init_w(k, out_dim, in_dim):
        bound = 1.0 / math.sqrt(in_dim)
        return jax.random.uniform(k, (out_dim, in_dim), jnp.float32, -bound, bound)

    params = {
        "Wq": init_w(kq, QUERY_DIM, QUERY_DIM),        # to_q, bias=False
        "Wk": init_w(kk, QUERY_DIM, CONTEXT_DIM),      # to_k, bias=False
        "Wv": init_w(kv, QUERY_DIM, CONTEXT_DIM),      # to_v, bias=False
        "Wo": init_w(ko, QUERY_DIM, QUERY_DIM),        # to_out weight
        "bo": jax.random.uniform(kb, (QUERY_DIM,), jnp.float32,
                                 -1.0 / math.sqrt(QUERY_DIM),
                                 1.0 / math.sqrt(QUERY_DIM)),  # to_out bias
    }

    out = cross_attention(x, context, params, HEADS)
    out = jax.block_until_ready(out)

    ref = cross_attention_ref(x, context, params, HEADS)
    assert out.shape == (B, N, QUERY_DIM)
    # bf16 MXU operands (f32 accumulate / f32 softmax, approx reciprocal) ->
    # looser tolerance than a pure-f32 pipeline; values are O(1) so 5e-2
    # comfortably bounds bf16 operand rounding while still catching real bugs.
    assert jnp.allclose(out, ref, atol=5e-2, rtol=5e-2), "mismatch vs reference"

    print("KERNEL_OK")
</pallas_src>

<mosaic_0001>
module attributes {stable_mosaic.version = 11 : i64} {
  func.func @linear_kernel(%arg0: i32, %arg1: i32, %arg2: i32, %arg3: memref<32x32xbf16, #tpu.memory_space<vmem>>, %arg4: memref<32x512xbf16, #tpu.memory_space<vmem>>, %arg5: memref<32x512xbf16, #tpu.memory_space<vmem>>, %arg6: memref<32x512xf32, #tpu.memory_space<vmem>>) attributes {dimension_semantics = [#tpu.dimension_semantics<parallel>, #tpu.dimension_semantics<parallel>, #tpu.dimension_semantics<arbitrary>], iteration_bounds = array<i64: 1, 1, 1>, scalar_prefetch = 0 : i64, scratch_operands = 1 : i64, tpu.core_type = #tpu.core_type<tc>, window_params = [{transform_indices = @transform_0, window_bounds = array<i64: 32, 32>}, {transform_indices = @transform_1, window_bounds = array<i64: 32, 512>}, {transform_indices = @transform_2, window_bounds = array<i64: 32, 512>}]} {
    %c0_i32 = arith.constant 0 : i32
    %0 = arith.cmpi eq, %arg2, %c0_i32 : i32
    %1 = arith.extui %0 : i1 to i32
    %c0_i32_0 = arith.constant 0 : i32
    %2 = arith.cmpi ne, %1, %c0_i32_0 : i32
    scf.if %2 {
      %cst_10 = arith.constant 0.000000e+00 : f32
      %12 = vector.broadcast %cst_10 : f32 to vector<32x512xf32>
      %c0_11 = arith.constant 0 : index
      %c0_12 = arith.constant 0 : index
      %13 = vector.load %arg6[%c0_11, %c0_12] : memref<32x512xf32, #tpu.memory_space<vmem>>, vector<32x512xf32>
      tpu.vector_store %arg6[%c0_11, %c0_12], %12 {strides = array<i32>} : memref<32x512xf32, #tpu.memory_space<vmem>>, vector<32x512xf32>,
    } else {
    }
    %c0 = arith.constant 0 : index
    %c0_1 = arith.constant 0 : index
    %3 = vector.load %arg6[%c0, %c0_1] : memref<32x512xf32, #tpu.memory_space<vmem>>, vector<32x512xf32>
    %c0_2 = arith.constant 0 : index
    %c0_3 = arith.constant 0 : index
    %4 = vector.load %arg3[%c0_2, %c0_3] : memref<32x32xbf16, #tpu.memory_space<vmem>>, vector<32x32xbf16>
    %c0_4 = arith.constant 0 : index
    %c0_5 = arith.constant 0 : index
    %5 = vector.load %arg4[%c0_4, %c0_5] : memref<32x512xbf16, #tpu.memory_space<vmem>>, vector<32x512xbf16>
    %cst = arith.constant dense<0.000000e+00> : vector<32x512xf32>
    %6 = tpu.matmul %4, %5, %cst {dimension_numbers = #tpu.dot_dimension_numbers<[1], [0], [0], [1], [0, 0, 1, 1], [], []>} : vector<32x32xbf16>, vector<32x512xbf16>, vector<32x512xf32> -> vector<32x512xf32>
    %7 = arith.addf %3, %6 : vector<32x512xf32>
    %c0_6 = arith.constant 0 : index
    %c0_7 = arith.constant 0 : index
    %8 = vector.load %arg6[%c0_6, %c0_7] : memref<32x512xf32, #tpu.memory_space<vmem>>, vector<32x512xf32>
    tpu.vector_store %arg6[%c0_6, %c0_7], %7 {strides = array<i32>} : memref<32x512xf32, #tpu.memory_space<vmem>>, vector<32x512xf32>,
    %c0_i32_8 = arith.constant 0 : i32
    %9 = arith.cmpi eq, %arg2, %c0_i32_8 : i32
    %10 = arith.extui %9 : i1 to i32
    %c0_i32_9 = arith.constant 0 : i32
    %11 = arith.cmpi ne, %10, %c0_i32_9 : i32
    scf.if %11 {
      %c0_10 = arith.constant 0 : index
      %c0_11 = arith.constant 0 : index
      %12 = vector.load %arg6[%c0_10, %c0_11] : memref<32x512xf32, #tpu.memory_space<vmem>>, vector<32x512xf32>
      %13 = arith.truncf %12 : vector<32x512xf32> to vector<32x512xbf16>
      %c0_12 = arith.constant 0 : index
      %c0_13 = arith.constant 0 : index
      %14 = vector.load %arg5[%c0_12, %c0_13] : memref<32x512xbf16, #tpu.memory_space<vmem>>, vector<32x512xbf16>
      tpu.vector_store %arg5[%c0_12, %c0_13], %13 {strides = array<i32>} : memref<32x512xbf16, #tpu.memory_space<vmem>>, vector<32x512xbf16>,
    } else {
    }
    return
  }
  func.func @transform_0(%arg0: i32, %arg1: i32, %arg2: i32) -> (i32, i32) {
    %c0_i32 = arith.constant 0 : i32
    return %arg0, %arg2 : i32, i32
  }
  func.func @transform_1(%arg0: i32, %arg1: i32, %arg2: i32) -> (i32, i32) {
    %c0_i32 = arith.constant 0 : i32
    return %arg2, %arg1 : i32, i32
  }
  func.func @transform_2(%arg0: i32, %arg1: i32, %arg2: i32) -> (i32, i32) {
    %c0_i32 = arith.constant 0 : i32
    return %arg0, %arg1 : i32, i32
  }
}

</mosaic_0001>

<llo_original>
// kernel: tpu_custom_call.1
$region0: #{tpu_custom_call.1}
  #allocation0 [shape = 'u32[]', space=smem, size = 0x4, offset = 0x4, fixed_abs, tag = 'smem constant byte address 0x4 - core index']
  #allocation1 [shape = 'u32[144,128]{1,0:T(1,128)}', space=vmem, size = 0x12000, scoped, tag = 'internal scratch']
  #allocation2 [shape = 'f32[32,512]{1,0:T(8,128)}', space=vmem, size = 0x10000, scoped, tag = 'scratch operand']
  %s0 = inlined_call_operand.hbm [shape: bf16[32,32], index: 0, kind: input, shape index: {}]
  %s1 = inlined_call_operand.hbm [shape: bf16[32,512], index: 1, kind: input, shape index: {}]
  %s2 = inlined_call_operand.hbm [shape: bf16[32,512], index: 2, kind: output, shape index: {}]
  %s3 = sld [smem:[#allocation0]]
  $region34: #{tpu_custom_call.1} parent=0
    _
  %s5 = ssub.s32 1, %s3
  %s6 = scalar_select 0, %s5, %s3
  $region1: #{tpu_custom_call.1} parent=0
    #allocation3 [shape = 'u8[8192]{0}', space=vmem, size = 0x2000, scoped, tag = 'input window, operand 0, single buffered']
    #allocation4 [shape = 's32[1]{0}', space=sflag, size = 0x4, scoped, tag = 'scoped memory for tpu_custom_call.1']
    #allocation5 [shape = 's32[1]{0}', space=sflag, size = 0x4, scoped, tag = 'scoped memory for tpu_custom_call.1']
    #allocation6 [shape = 'u8[32768]{0}', space=vmem, size = 0x8000, scoped, tag = 'input window, operand 1, single buffered']
    #allocation7 [shape = 's32[1]{0}', space=sflag, size = 0x4, scoped, tag = 'scoped memory for tpu_custom_call.1']
    #allocation8 [shape = 'u8[32768]{0}', space=vmem, size = 0x8000, scoped, tag = 'output window, operand 0, single buffered']
    %7 = vsyncpa [#allocation4], 0
    %8 = vsyncpa [#allocation7], 0
    %9 = vsyncpa [#allocation5], 0
    // Predicated region
    $region2: #{tpu_custom_call.1} parent=1 // pred_check
      _
    $region3: #{tpu_custom_call.1} parent=1 // pred_check_branch
      %11 = sbr.rel (0) target = $region5
    $region4: #{tpu_custom_call.1} parent=1 // pred_region
      %s13 = ssub.s32 256, 256
      %14 = vsyncadd [#allocation4], %s13
      %s15 = sshll.u32 [#allocation3], 4
      %s16 = int_to_ptr.vmem [resolvable:$true] %s15
      %21 = dma.hbm_to_vmem [thread:$0]  %s0, 256, %s16, [#allocation4], 64, 64, 4
    $region5: #{tpu_custom_call.1} parent=1 // pred_fallthru
      _
    // Predicated region
    $region6: #{tpu_custom_call.1} parent=1 // pred_check
      _
    $region7: #{tpu_custom_call.1} parent=1 // pred_check_branch
      %23 = sbr.rel (0) target = $region9
    $region8: #{tpu_custom_call.1} parent=1 // pred_region
      %s25 = ssub.s32 1024, 1024
      %26 = vsyncadd [#allocation7], %s25
      %s27 = sshll.u32 [#allocation6], 4
      %s28 = int_to_ptr.vmem [resolvable:$true] %s27
      %33 = dma.hbm_to_vmem [thread:$0]  %s1, 1024, %s28, [#allocation7], 256, 256, 16
    $region9: #{tpu_custom_call.1} parent=1 // pred_fallthru
      _
    // Predicated region
    $region10: #{tpu_custom_call.1} parent=1 // pred_check
      _
    $region11: #{tpu_custom_call.1} parent=1 // pred_check_branch
      %35 = sbr.rel (0) target = $region13
    $region12: #{tpu_custom_call.1} parent=1 // pred_region
      %36 = dma.done [#allocation4], 256
    $region13: #{tpu_custom_call.1} parent=1 // pred_fallthru
      _
    // Predicated region
    $region14: #{tpu_custom_call.1} parent=1 // pred_check
      _
    $region15: #{tpu_custom_call.1} parent=1 // pred_check_branch
      %38 = sbr.rel (0) target = $region17
    $region16: #{tpu_custom_call.1} parent=1 // pred_region
      %39 = dma.done [#allocation7], 1024
    $region17: #{tpu_custom_call.1} parent=1 // pred_fallthru
      _
    %p41 = scmp.eq.s32.totalorder 0, 0
    // Predicated region
    $region18: #{tpu_custom_call.1} parent=1 // pred_check
      %p42 = pneg %p41
    $region19: #{tpu_custom_call.1} parent=1 // pred_check_branch
      %44 = sbr.rel (%p42) target = $region21
    $region20: #{tpu_custom_call.1} parent=1 // pred_region
      %45 = vst [vmem:[#allocation2] sm:$0xff] 0.0
      %46 = vst [vmem:[#allocation2 + $0x8] sm:$0xff] 0.0
      %47 = vst [vmem:[#allocation2 + $0x10] sm:$0xff] 0.0
      %48 = vst [vmem:[#allocation2 + $0x18] sm:$0xff] 0.0
      %49 = vst [vmem:[#allocation2 + $0x20] sm:$0xff] 0.0
      %50 = vst [vmem:[#allocation2 + $0x28] sm:$0xff] 0.0
      %51 = vst [vmem:[#allocation2 + $0x30] sm:$0xff] 0.0
      %52 = vst [vmem:[#allocation2 + $0x38] sm:$0xff] 0.0
      %53 = vst [vmem:[#allocation2 + $0x40] sm:$0xff] 0.0
      %54 = vst [vmem:[#allocation2 + $0x48] sm:$0xff] 0.0
      %55 = vst [vmem:[#allocation2 + $0x50] sm:$0xff] 0.0
      %56 = vst [vmem:[#allocation2 + $0x58] sm:$0xff] 0.0
      %57 = vst [vmem:[#allocation2 + $0x60] sm:$0xff] 0.0
      %58 = vst [vmem:[#allocation2 + $0x68] sm:$0xff] 0.0
      %59 = vst [vmem:[#allocation2 + $0x70] sm:$0xff] 0.0
      %60 = vst [vmem:[#allocation2 + $0x78] sm:$0xff] 0.0
    $region21: #{tpu_custom_call.1} parent=1 // pred_fallthru
      _
    %v61 = vld [vmem:[#allocation2] sm:$0xff]
    %v62 = vld [vmem:[#allocation2 + $0x8] sm:$0xff]
    %v63 = vld [vmem:[#allocation2 + $0x10] sm:$0xff]
    %v64 = vld [vmem:[#allocation2 + $0x18] sm:$0xff]
    %v65 = vld [vmem:[#allocation2 + $0x20] sm:$0xff]
    %v66 = vld [vmem:[#allocation2 + $0x28] sm:$0xff]
    %v67 = vld [vmem:[#allocation2 + $0x30] sm:$0xff]
    %v68 = vld [vmem:[#allocation2 + $0x38] sm:$0xff]
    %v69 = vld [vmem:[#allocation2 + $0x40] sm:$0xff]
    %v70 = vld [vmem:[#allocation2 + $0x48] sm:$0xff]
    %v71 = vld [vmem:[#allocation2 + $0x50] sm:$0xff]
    %v72 = vld [vmem:[#allocation2 + $0x58] sm:$0xff]
    %v73 = vld [vmem:[#allocation2 + $0x60] sm:$0xff]
    %v74 = vld [vmem:[#allocation2 + $0x68] sm:$0xff]
    %v75 = vld [vmem:[#allocation2 + $0x70] sm:$0xff]
    %v76 = vld [vmem:[#allocation2 + $0x78] sm:$0xff]
    %v77 = vld [vmem:[#allocation3] sm:$0xf]
    %v78 = vld [vmem:[#allocation3 + $0x4] sm:$0xf]
    %v79 = vld [vmem:[#allocation3 + $0x8] sm:$0xf]
    %v80 = vld [vmem:[#allocation3 + $0xc] sm:$0xf]
    %v81 = vld [vmem:[#allocation6] sm:$0xff]
    %v82 = vld [vmem:[#allocation6 + $0x8] sm:$0xff]
    %v83 = vld [vmem:[#allocation6 + $0x10] sm:$0xff]
    %v84 = vld [vmem:[#allocation6 + $0x18] sm:$0xff]
    %v85 = vld [vmem:[#allocation6 + $0x20] sm:$0xff]
    %v86 = vld [vmem:[#allocation6 + $0x28] sm:$0xff]
    %v87 = vld [vmem:[#allocation6 + $0x30] sm:$0xff]
    %v88 = vld [vmem:[#allocation6 + $0x38] sm:$0xff]
    %v93 = vunpack.c.l.b16 %v77
    %v94 = vunpack.c.l.b16 %v78
    %v95 = vunpack.c.l.b16 %v79
    %v96 = vunpack.c.l.b16 %v80
    %v97 = vpack.c.b16 %v94, %v93
    %v98 = vpack.c.b16 %v96, %v95
    %v107 = vunpack.c.l.b16 %v81
    %v108 = vunpack.c.h.b16 %v81
    %v109 = vunpack.c.l.b16 %v82
    %v110 = vunpack.c.h.b16 %v82
    %v111 = vunpack.c.l.b16 %v83
    %v112 = vunpack.c.h.b16 %v83
    %v113 = vunpack.c.l.b16 %v84
    %v114 = vunpack.c.h.b16 %v84
    %v115 = vunpack.c.l.b16 %v85
    %v116 = vunpack.c.h.b16 %v85
    %v117 = vunpack.c.l.b16 %v86
    %v118 = vunpack.c.h.b16 %v86
    %v119 = vunpack.c.l.b16 %v87
    %v120 = vunpack.c.h.b16 %v87
    %v121 = vunpack.c.l.b16 %v88
    %v122 = vunpack.c.h.b16 %v88
    %v123 = vpack.c.b16 %v111, %v107
    %v124 = vpack.c.b16 %v112, %v108
    %v125 = vpack.c.b16 %v113, %v109
    %v126 = vpack.c.b16 %v114, %v110
    %v127 = vpack.c.b16 %v119, %v115
    %v128 = vpack.c.b16 %v120, %v116
    %v129 = vpack.c.b16 %v121, %v117
    %v130 = vpack.c.b16 %v122, %v118
    %vm139 = vcmask 261120
    %v141 = vsel %vm139, %v97, 0
    %v144 = vsel %vm139, %v98, 0
    %146 = vmatprep.subr.bf16.mxu0 0
    %147 = vmatpush1.bf16.msra.mxu0 0
    %148 = vmatprep.subr.bf16.mxu0 0
    %149 = vmatpush1.bf16.msra.mxu0 0
    %150 = vmatprep.subr.bf16.mxu0 0
    %151 = vmatpush1.bf16.msra.mxu0 0
    %152 = vmatprep.subr.bf16.mxu0 0
    %153 = vmatpush1.bf16.msra.mxu0 0
    %154 = vmatprep.subr.bf16.mxu0 0
    %155 = vmatpush1.bf16.msra.mxu0 0
    %156 = vmatprep.subr.bf16.mxu0 0
    %157 = vmatpush1.bf16.msra.mxu0 0
    %158 = vmatprep.subr.bf16.mxu0 %v128
    %159 = vmatpush1.bf16.msra.mxu0 %v127
    %160 = vmatprep.subr.bf16.mxu0 %v124
    %161 = vmatpush1.bf16.msra.mxu0 %v123
    %162 = vmatprep.subr.bf16.mxu0 0
    %163 = vmatpush2.bf16.msra.mxu0 0
    %164 = vmatprep.subr.bf16.mxu0 0
    %165 = vmatpush2.bf16.msra.mxu0 0
    %166 = vmatprep.subr.bf16.mxu0 0
    %167 = vmatpush2.bf16.msra.mxu0 0
    %168 = vmatprep.subr.bf16.mxu0 0
    %169 = vmatpush2.bf16.msra.mxu0 0
    %170 = vmatprep.subr.bf16.mxu0 0
    %171 = vmatpush2.bf16.msra.mxu0 0
    %172 = vmatprep.subr.bf16.mxu0 0
    %173 = vmatpush2.bf16.msra.mxu0 0
    %174 = vmatprep.subr.bf16.mxu0 0
    %175 = vmatpush2.bf16.msra.mxu0 0
    %176 = vmatprep.subr.bf16.mxu0 0
    %177 = vmatpush2.bf16.msra.mxu0 0
    %178 = vmatprep.mubr.bf16.mxu0 0
    %179 = vmatmul.mubr.bf16.gmra.mxu0 %v141
    %v180 = vpop.f32.mrf.mxu0
    %v181 = vadd.f32 0.0, %v180
    %v182 = vpop.f32.mrf.mxu0
    %v183 = vadd.f32 0.0, %v182
    %v184 = vpop.f32.mrf.mxu0
    %v185 = vadd.f32 0.0, %v184
    %v186 = vpop.f32.mrf.mxu0
    %v187 = vadd.f32 0.0, %v186
    %188 = vmatprep.mubr.bf16.mxu0 0
    %189 = vmatmul.mubr.bf16.gmra.mxu0 %v144
    %v190 = vpop.f32.mrf.mxu0
    %v191 = vadd.f32 0.0, %v190
    %v192 = vpop.f32.mrf.mxu0
    %v193 = vadd.f32 0.0, %v192
    %v194 = vpop.f32.mrf.mxu0
    %v195 = vadd.f32 0.0, %v194
    %v196 = vpop.f32.mrf.mxu0
    %v197 = vadd.f32 0.0, %v196
    %198 = vdwg.mxu0
    %199 = vmatprep.subr.bf16.mxu0 0
    %200 = vmatpush1.bf16.msra.mxu0 0
    %201 = vmatprep.subr.bf16.mxu0 0
    %202 = vmatpush1.bf16.msra.mxu0 0
    %203 = vmatprep.subr.bf16.mxu0 0
    %204 = vmatpush1.bf16.msra.mxu0 0
    %205 = vmatprep.subr.bf16.mxu0 0
    %206 = vmatpush1.bf16.msra.mxu0 0
    %207 = vmatprep.subr.bf16.mxu0 0
    %208 = vmatpush1.bf16.msra.mxu0 0
    %209 = vmatprep.subr.bf16.mxu0 0
    %210 = vmatpush1.bf16.msra.mxu0 0
    %211 = vmatprep.subr.bf16.mxu0 %v130
    %212 = vmatpush1.bf16.msra.mxu0 %v129
    %213 = vmatprep.subr.bf16.mxu0 %v126
    %214 = vmatpush1.bf16.msra.mxu0 %v125
    %215 = vmatprep.subr.bf16.mxu0 0
    %216 = vmatpush2.bf16.msra.mxu0 0
    %217 = vmatprep.subr.bf16.mxu0 0
    %218 = vmatpush2.bf16.msra.mxu0 0
    %219 = vmatprep.subr.bf16.mxu0 0
    %220 = vmatpush2.bf16.msra.mxu0 0
    %221 = vmatprep.subr.bf16.mxu0 0
    %222 = vmatpush2.bf16.msra.mxu0 0
    %223 = vmatprep.subr.bf16.mxu0 0
    %224 = vmatpush2.bf16.msra.mxu0 0
    %225 = vmatprep.subr.bf16.mxu0 0
    %226 = vmatpush2.bf16.msra.mxu0 0
    %227 = vmatprep.subr.bf16.mxu0 0
    %228 = vmatpush2.bf16.msra.mxu0 0
    %229 = vmatprep.subr.bf16.mxu0 0
    %230 = vmatpush2.bf16.msra.mxu0 0
    %231 = vmatprep.mubr.bf16.mxu0 0
    %232 = vmatmul.mubr.bf16.gmra.mxu0 %v141
    %v233 = vpop.f32.mrf.mxu0
    %v234 = vadd.f32 0.0, %v233
    %v235 = vpop.f32.mrf.mxu0
    %v236 = vadd.f32 0.0, %v235
    %v237 = vpop.f32.mrf.mxu0
    %v238 = vadd.f32 0.0, %v237
    %v239 = vpop.f32.mrf.mxu0
    %v240 = vadd.f32 0.0, %v239
    %241 = vmatprep.mubr.bf16.mxu0 0
    %242 = vmatmul.mubr.bf16.gmra.mxu0 %v144
    %v243 = vpop.f32.mrf.mxu0
    %v244 = vadd.f32 0.0, %v243
    %v245 = vpop.f32.mrf.mxu0
    %v246 = vadd.f32 0.0, %v245
    %v247 = vpop.f32.mrf.mxu0
    %v248 = vadd.f32 0.0, %v247
    %v249 = vpop.f32.mrf.mxu0
    %v250 = vadd.f32 0.0, %v249
    %251 = vdwg.mxu0
    %v252 = vadd.f32 %v61, %v181
    %v253 = vadd.f32 %v62, %v183
    %v254 = vadd.f32 %v63, %v234
    %v255 = vadd.f32 %v64, %v236
    %v256 = vadd.f32 %v65, %v185
    %v257 = vadd.f32 %v66, %v187
    %v258 = vadd.f32 %v67, %v238
    %v259 = vadd.f32 %v68, %v240
    %v260 = vadd.f32 %v69, %v191
    %v261 = vadd.f32 %v70, %v193
    %v262 = vadd.f32 %v71, %v244
    %v263 = vadd.f32 %v72, %v246
    %v264 = vadd.f32 %v73, %v195
    %v265 = vadd.f32 %v74, %v197
    %v266 = vadd.f32 %v75, %v248
    %v267 = vadd.f32 %v76, %v250
    %268 = vst [vmem:[#allocation2] sm:$0xff] %v252
    %269 = vst [vmem:[#allocation2 + $0x8] sm:$0xff] %v253
    %270 = vst [vmem:[#allocation2 + $0x10] sm:$0xff] %v254
    %271 = vst [vmem:[#allocation2 + $0x18] sm:$0xff] %v255
    %272 = vst [vmem:[#allocation2 + $0x20] sm:$0xff] %v256
    %273 = vst [vmem:[#allocation2 + $0x28] sm:$0xff] %v257
    %274 = vst [vmem:[#allocation2 + $0x30] sm:$0xff] %v258
    %275 = vst [vmem:[#allocation2 + $0x38] sm:$0xff] %v259
    %276 = vst [vmem:[#allocation2 + $0x40] sm:$0xff] %v260
    %277 = vst [vmem:[#allocation2 + $0x48] sm:$0xff] %v261
    %278 = vst [vmem:[#allocation2 + $0x50] sm:$0xff] %v262
    %279 = vst [vmem:[#allocation2 + $0x58] sm:$0xff] %v263
    %280 = vst [vmem:[#allocation2 + $0x60] sm:$0xff] %v264
    %281 = vst [vmem:[#allocation2 + $0x68] sm:$0xff] %v265
    %282 = vst [vmem:[#allocation2 + $0x70] sm:$0xff] %v266
    %283 = vst [vmem:[#allocation2 + $0x78] sm:$0xff] %v267
    // Predicated region
    $region22: #{tpu_custom_call.1} parent=1 // pred_check
      %p284 = pneg %p41
    $region23: #{tpu_custom_call.1} parent=1 // pred_check_branch
      %286 = sbr.rel (%p284) target = $region25
    $region24: #{tpu_custom_call.1} parent=1 // pred_region
      %v287 = vld [vmem:[#allocation2] sm:$0xff]
      %v288 = vld [vmem:[#allocation2 + $0x8] sm:$0xff]
      %v289 = vld [vmem:[#allocation2 + $0x10] sm:$0xff]
      %v290 = vld [vmem:[#allocation2 + $0x18] sm:$0xff]
      %v291 = vld [vmem:[#allocation2 + $0x20] sm:$0xff]
      %v292 = vld [vmem:[#allocation2 + $0x28] sm:$0xff]
      %v293 = vld [vmem:[#allocation2 + $0x30] sm:$0xff]
      %v294 = vld [vmem:[#allocation2 + $0x38] sm:$0xff]
      %v295 = vld [vmem:[#allocation2 + $0x40] sm:$0xff]
      %v296 = vld [vmem:[#allocation2 + $0x48] sm:$0xff]
      %v297 = vld [vmem:[#allocation2 + $0x50] sm:$0xff]
      %v298 = vld [vmem:[#allocation2 + $0x58] sm:$0xff]
      %v299 = vld [vmem:[#allocation2 + $0x60] sm:$0xff]
      %v300 = vld [vmem:[#allocation2 + $0x68] sm:$0xff]
      %v301 = vld [vmem:[#allocation2 + $0x70] sm:$0xff]
      %v302 = vld [vmem:[#allocation2 + $0x78] sm:$0xff]
      %v303 = vpack.c.bf16 %v291, %v287
      %v304 = vpack.c.bf16 %v292, %v288
      %v305 = vpack.c.bf16 %v293, %v289
      %v306 = vpack.c.bf16 %v294, %v290
      %v307 = vpack.c.bf16 %v299, %v295
      %v308 = vpack.c.bf16 %v300, %v296
      %v309 = vpack.c.bf16 %v301, %v297
      %v310 = vpack.c.bf16 %v302, %v298
      %v319 = vunpack.c.l.b16 %v303
      %v320 = vunpack.c.l.b16 %v304
      %v321 = vunpack.c.l.b16 %v305
      %v322 = vunpack.c.l.b16 %v306
      %v323 = vunpack.c.h.b16 %v303
      %v324 = vunpack.c.h.b16 %v304
      %v325 = vunpack.c.h.b16 %v305
      %v326 = vunpack.c.h.b16 %v306
      %v327 = vunpack.c.l.b16 %v307
      %v328 = vunpack.c.l.b16 %v308
      %v329 = vunpack.c.l.b16 %v309
      %v330 = vunpack.c.l.b16 %v310
      %v331 = vunpack.c.h.b16 %v307
      %v332 = vunpack.c.h.b16 %v308
      %v333 = vunpack.c.h.b16 %v309
      %v334 = vunpack.c.h.b16 %v310
      %v335 = vpack.c.b16 %v320, %v319
      %v336 = vpack.c.b16 %v322, %v321
      %v337 = vpack.c.b16 %v324, %v323
      %v338 = vpack.c.b16 %v326, %v325
      %v339 = vpack.c.b16 %v328, %v327
      %v340 = vpack.c.b16 %v330, %v329
      %v341 = vpack.c.b16 %v332, %v331
      %v342 = vpack.c.b16 %v334, %v333
      %351 = vst [vmem:[#allocation8] sm:$0xff] %v335
      %352 = vst [vmem:[#allocation8 + $0x8] sm:$0xff] %v336
      %353 = vst [vmem:[#allocation8 + $0x10] sm:$0xff] %v337
      %354 = vst [vmem:[#allocation8 + $0x18] sm:$0xff] %v338
      %355 = vst [vmem:[#allocation8 + $0x20] sm:$0xff] %v339
      %356 = vst [vmem:[#allocation8 + $0x28] sm:$0xff] %v340
      %357 = vst [vmem:[#allocation8 + $0x30] sm:$0xff] %v341
      %358 = vst [vmem:[#allocation8 + $0x38] sm:$0xff] %v342
    $region25: #{tpu_custom_call.1} parent=1 // pred_fallthru
      _
    // Predicated region
    $region26: #{tpu_custom_call.1} parent=1 // pred_check
      _
    $region27: #{tpu_custom_call.1} parent=1 // pred_check_branch
      %360 = sbr.rel (0) target = $region29
    $region28: #{tpu_custom_call.1} parent=1 // pred_region
      %s362 = ssub.s32 1024, 1024
      %363 = vsyncadd [#allocation5], %s362
      %s364 = sshll.u32 [#allocation8], 4
      %s365 = int_to_ptr.vmem [resolvable:$true] %s364
      %370 = dma.vmem_to_hbm [thread:$0]  %s365, 1024, %s2, [#allocation5], 256, 256, 16
    $region29: #{tpu_custom_call.1} parent=1 // pred_fallthru
      _
    // Predicated region
    $region30: #{tpu_custom_call.1} parent=1 // pred_check
      _
    $region31: #{tpu_custom_call.1} parent=1 // pred_check_branch
      %372 = sbr.rel (0) target = $region33
    $region32: #{tpu_custom_call.1} parent=1 // pred_region
      %373 = dma.done [#allocation5], 1024
    $region33: #{tpu_custom_call.1} parent=1 // pred_fallthru
      _
    %374 = vsyncpa [#allocation4], 1
    %375 = vsyncpa [#allocation7], 1
    %376 = vsyncpa [#allocation5], 1

</llo_original>
